<compile_context>
chip_gen: v6e
topology: v6e:2x2x1
jax: 0.10.0
libtpu: 0.0.40
codegen_flags: <defaults>
</compile_context>

<pallas_src>
import jax
import jax.numpy as jnp
from jax.experimental import pallas as pl
from jax.experimental.pallas import tpu as pltpu


def _sbert_head_kernel(tok_ref, mask_ref, ta_ref, tp_ref, w_ref, b_ref, out_ref):
    # tok_ref : (B, S, D)    token embeddings (encoder[0] output stand-in), native dtype
    # mask_ref: (B, S)       attention mask (int), lane-major over S
    # ta_ref  : (B, S, T+1)  multi-hot type assignment; column T is all-ones (-> token count)
    # tp_ref  : (T, D)       type embedding parameters
    # w_ref   : (D, Dout)    out_mlp weight (x @ W layout)
    # b_ref   : (1, Dout)    out_mlp bias
    # out_ref : (B, Dout)
    x = tok_ref[...]                                     # [B,S,D] native dtype (bf16 MXU path)
    cdt = x.dtype

    # Mask in native int dtype; int -> f32 -> compute-dtype keeps the convert on
    # well-supported paths. Tiny [B,S] tile, negligible cost.
    m = mask_ref[...].astype(jnp.float32).astype(cdt)    # [B,S]
    ta = ta_ref[...].astype(cdt)                         # [B,S,T+1]

    m3 = m[:, None, :]                                   # [B,1,S] lane-major mask row

    # encoder[1]: masked sum over S as a batched [1,S]@[S,D] MXU contraction,
    # native-dtype inputs, f32 accumulation.
    tok_sum = jnp.einsum('bqs,bsd->bqd', m3, x,
                         preferred_element_type=jnp.float32)[:, 0, :]     # [B,D]

    # Fused pooled type counts + masked token count in a single tiny contraction
    # (ta's last column is all-ones). No XLU lane reduce needed for cnt.
    pooled_tc = jnp.einsum('bqs,bst->bqt', m3, ta,
                           preferred_element_type=jnp.float32)[:, 0, :]   # [B,T+1]
    num_types = tp_ref.shape[0]
    ta_sum = pooled_tc[:, :num_types]                                     # [B,T]
    cnt = pooled_tc[:, num_types:num_types + 1]                           # [B,1]

    # Type-embedding contribution, distributed past the (linear) pooling:
    #   summed = m@tok + (m@ta) @ tp
    # K=T matmul on the otherwise-idle MXU (ta_sum holds small integer counts, exact
    # in bf16), instead of 2*T lane/sublane broadcasts on the XLU/load slots.
    summed = tok_sum + jnp.dot(ta_sum.astype(tp_ref.dtype), tp_ref[...],
                               preferred_element_type=jnp.float32)        # [B,D]

    # Masked mean. The approximate EUP reciprocal's per-row scale error cancels exactly
    # in the L2 normalization below, so the final embedding is unaffected.
    pooled = summed * pl.reciprocal(jnp.maximum(cnt, 1e-9), approx=True)  # [B,D] f32

    # encoder[2]: L2 normalize (F.normalize p=2, eps=1e-12) via EUP rsqrt; f32 math on
    # the tiny pooled tensors (v5e VPU/EUP have no bf16).
    sq = jnp.sum(pooled * pooled, axis=-1, keepdims=True)                 # [B,1]
    normed = pooled * jax.lax.rsqrt(jnp.maximum(sq, 1e-24))               # [B,D] f32

    # out_mlp Linear + tanh (use_out_mlp=True, use_out_tanh=True). Matmul runs in the
    # weight's native dtype (bf16 fast MXU path) with f32 accumulation; bias add and
    # tanh stay in f32. out_dropout: identity in eval mode.
    y = jnp.dot(normed.astype(w_ref.dtype), w_ref[...],
                preferred_element_type=jnp.float32) + b_ref[...].astype(jnp.float32)
    out_ref[...] = jnp.tanh(y)                                            # [B,Dout]


def sbert_layer_forward(token_embeddings, attention_mask, type_assign_aug,
                        type_params, out_mlp_w, out_mlp_b):
    """token_embeddings: [B,S,D]   encoder[0] output stand-in (bf16 or f32, native dtype)
       attention_mask  : [B,S]     0/1 mask in its native (integer) dtype
       type_assign_aug : [B,S,T+1] multi-hot type assignment; column T must be all-ones
                                   (built for free by the host alongside the multi-hot scatter)
       type_params     : [T,D]     type embedding parameters (native dtype)
       out_mlp_w       : [D,Dout]  out_mlp weight, x @ W layout (native dtype)
       out_mlp_b       : [Dout] or [1,Dout] bias
    """
    B, S, D = token_embeddings.shape
    T = type_params.shape[0]
    Dout = out_mlp_w.shape[1]
    assert type_assign_aug.shape == (B, S, T + 1), "expected trailing all-ones column"

    b2 = out_mlp_b.reshape(1, Dout)   # metadata-only reshape; no dtype cast in the wrapper

    # Grid-invariant parameters: single-buffered (default double-buffering is wasted VMEM
    # for constant index_maps; buys tile headroom at production sizes, esp. v7x 64 MiB).
    single = pl.Buffered(1)

    # Single grid step: the whole (tiny) batch per invocation. For production batch sizes,
    # switch to a batch-tiled grid with dimension_semantics=("parallel",) (v7x: 2 TCs) and
    # size the batch tile against VMEM (64 MiB v7x, 128 MiB v6e/v5e; raise vmem_limit_bytes
    # above the 32 MiB scoped default as needed).
    out = pl.pallas_call(
        _sbert_head_kernel,
        out_shape=jax.ShapeDtypeStruct((B, Dout), jnp.float32),
        grid=(1,),
        in_specs=[
            pl.BlockSpec((B, S, D), lambda i: (0, 0, 0)),
            pl.BlockSpec((B, S), lambda i: (0, 0)),
            pl.BlockSpec((B, S, T + 1), lambda i: (0, 0, 0)),
            pl.BlockSpec((T, D), lambda i: (0, 0), pipeline_mode=single),
            pl.BlockSpec((D, Dout), lambda i: (0, 0), pipeline_mode=single),
            pl.BlockSpec((1, Dout), lambda i: (0, 0), pipeline_mode=single),
        ],
        out_specs=pl.BlockSpec((B, Dout), lambda i: (0, 0)),
        compiler_params=pltpu.CompilerParams(
            dimension_semantics=("arbitrary",)),
    )(token_embeddings, attention_mask, type_assign_aug, type_params, out_mlp_w, b2)
    return out


def _reference(tok, mask, ta_aug, tp, w, b):
    """Pure-JAX reference in f32 (highest precision), consuming the same native-dtype inputs."""
    T = tp.shape[0]
    x = tok.astype(jnp.float32) + jnp.einsum(
        "bst,td->bsd", ta_aug[..., :T].astype(jnp.float32), tp.astype(jnp.float32),
        precision="highest")
    m = mask.astype(jnp.float32)[..., None]
    pooled = jnp.sum(x * m, axis=1) / jnp.maximum(jnp.sum(m, axis=1), 1e-9)
    normed = pooled / jnp.maximum(
        jnp.linalg.norm(pooled, axis=-1, keepdims=True), 1e-12)
    y = jnp.dot(normed, w.astype(jnp.float32), precision="highest") + \
        b.astype(jnp.float32).reshape(1, -1)
    return jnp.tanh(y)


if __name__ == "__main__":
    # Small shapes implied by the module: dim (self.dim) = 32, out_mlp = 48,
    # batch = 2 sentences, seq = 8 tokens, 2 type embeddings.
    B, S, D, T, Dout = 2, 8, 32, 2, 48
    key = jax.random.PRNGKey(0)
    k1, k2, k3, k4 = jax.random.split(key, 4)

    # Stand-in for encoder[0] output (pretrained BERT token embeddings), native bf16.
    token_embeddings = jax.random.normal(k1, (B, S, D), jnp.float32).astype(jnp.bfloat16)

    # Attention mask with padding on the second sentence, native integer dtype.
    attention_mask = jnp.array(
        [[1, 1, 1, 1, 1, 1, 1, 1],
         [1, 1, 1, 1, 1, 0, 0, 0]], dtype=jnp.int32)

    # Host-built token -> type-embedding assignment (multi-hot), emulating the "<type>"
    # annotation scatter in the PyTorch forward, augmented with an all-ones column so the
    # kernel's single contraction also yields the masked token count.
    type_assign_aug = jnp.zeros((B, S, T + 1), jnp.float32)
    type_assign_aug = type_assign_aug.at[0, 2, 0].set(1.0)
    type_assign_aug = type_assign_aug.at[0, 3, 1].set(1.0)
    type_assign_aug = type_assign_aug.at[1, 1, 0].set(1.0)
    type_assign_aug = type_assign_aug.at[1, 1, 1].set(1.0)   # token with two types
    type_assign_aug = type_assign_aug.at[:, :, T].set(1.0)   # ones column -> token count
    type_assign_aug = type_assign_aug.astype(jnp.bfloat16)

    # Parameters (deterministic init; type_embedding_init_div = 10), bf16 weights.
    type_params = (jax.random.normal(k2, (T, D), jnp.float32) / 10.0).astype(jnp.bfloat16)
    out_mlp_w_pt = jax.random.normal(k3, (Dout, D), jnp.float32) * (1.0 / jnp.sqrt(D))
    out_mlp_b = jax.random.normal(k4, (Dout,), jnp.float32) * 0.01
    out_mlp_w = out_mlp_w_pt.T.astype(jnp.bfloat16)          # [D, Dout] for x @ W layout

    out = sbert_layer_forward(token_embeddings, attention_mask, type_assign_aug,
                              type_params, out_mlp_w, out_mlp_b)
    out = jax.block_until_ready(out)

    ref = _reference(token_embeddings, attention_mask, type_assign_aug,
                     type_params, out_mlp_w, out_mlp_b)
    assert out.shape == (B, Dout)
    # Tolerance covers the bf16 MXU fast path for out_mlp (f32-accumulated), the EUP
    # fast-reciprocal / rsqrt / tanh path, and the reordered (distributed) pooling.
    assert jnp.allclose(out, ref, atol=5e-3, rtol=5e-3), "mismatch vs reference"
    print("KERNEL_OK")
</pallas_src>

<mosaic_0001>
module attributes {stable_mosaic.version = 11 : i64} {
  func.func @_sbert_head_kernel(%arg0: i32, %arg1: memref<2x8x32xbf16, #tpu.memory_space<vmem>>, %arg2: memref<2x8xi32, #tpu.memory_space<vmem>>, %arg3: memref<2x8x3xbf16, #tpu.memory_space<vmem>>, %arg4: memref<2x32xbf16, #tpu.memory_space<vmem>>, %arg5: memref<32x48xbf16, #tpu.memory_space<vmem>>, %arg6: memref<1x48xf32, #tpu.memory_space<vmem>>, %arg7: memref<2x48xf32, #tpu.memory_space<vmem>>) attributes {dimension_semantics = [#tpu.dimension_semantics<arbitrary>], iteration_bounds = array<i64: 1>, scalar_prefetch = 0 : i64, scratch_operands = 0 : i64, tpu.core_type = #tpu.core_type<tc>, window_params = [{pipeline_mode = #tpu.pipeline_mode<synchronous>, transform_indices = @transform_0, window_bounds = array<i64: 2, 8, 32>}, {pipeline_mode = #tpu.pipeline_mode<synchronous>, transform_indices = @transform_1, window_bounds = array<i64: 2, 8>}, {pipeline_mode = #tpu.pipeline_mode<synchronous>, transform_indices = @transform_2, window_bounds = array<i64: 2, 8, 3>}, {pipeline_mode = #tpu.pipeline_mode<synchronous>, transform_indices = @transform_3, window_bounds = array<i64: 2, 32>}, {pipeline_mode = #tpu.pipeline_mode<synchronous>, transform_indices = @transform_4, window_bounds = array<i64: 32, 48>}, {pipeline_mode = #tpu.pipeline_mode<synchronous>, transform_indices = @transform_5, window_bounds = array<i64: 1, 48>}, {pipeline_mode = #tpu.pipeline_mode<synchronous>, transform_indices = @transform_6, window_bounds = array<i64: 2, 48>}]} {
    %c0 = arith.constant 0 : index
    %c0_0 = arith.constant 0 : index
    %c0_1 = arith.constant 0 : index
    %0 = vector.load %arg1[%c0, %c0_0, %c0_1] : memref<2x8x32xbf16, #tpu.memory_space<vmem>>, vector<2x8x32xbf16>
    %c0_2 = arith.constant 0 : index
    %c0_3 = arith.constant 0 : index
    %1 = vector.load %arg2[%c0_2, %c0_3] : memref<2x8xi32, #tpu.memory_space<vmem>>, vector<2x8xi32>
    %2 = arith.sitofp %1 : vector<2x8xi32> to vector<2x8xf32>
    %3 = arith.truncf %2 : vector<2x8xf32> to vector<2x8xbf16>
    %c0_4 = arith.constant 0 : index
    %c0_5 = arith.constant 0 : index
    %c0_6 = arith.constant 0 : index
    %4 = vector.load %arg3[%c0_4, %c0_5, %c0_6] : memref<2x8x3xbf16, #tpu.memory_space<vmem>>, vector<2x8x3xbf16>
    %5 = vector.shape_cast %3 : vector<2x8xbf16> to vector<2x1x8xbf16>
    "tpu.trace_start"() <{level = 10 : i32, message = "bqs,bsd->bqd"}> : () -> ()
    %cst = arith.constant dense<0.000000e+00> : vector<2x1x32xf32>
    %6 = tpu.matmul %5, %0, %cst {dimension_numbers = #tpu.dot_dimension_numbers<[2], [1], [1], [2], [0, 0, 0, 1, 1, 2], [0], [0]>} : vector<2x1x8xbf16>, vector<2x8x32xbf16>, vector<2x1x32xf32> -> vector<2x1x32xf32>
    "tpu.trace_stop"() : () -> ()
    %7 = vector.shape_cast %6 : vector<2x1x32xf32> to vector<2x32xf32>
    "tpu.trace_start"() <{level = 10 : i32, message = "bqs,bst->bqt"}> : () -> ()
    %cst_7 = arith.constant dense<0.000000e+00> : vector<2x1x3xf32>
    %8 = tpu.matmul %5, %4, %cst_7 {dimension_numbers = #tpu.dot_dimension_numbers<[2], [1], [1], [2], [0, 0, 0, 1, 1, 2], [0], [0]>} : vector<2x1x8xbf16>, vector<2x8x3xbf16>, vector<2x1x3xf32> -> vector<2x1x3xf32>
    "tpu.trace_stop"() : () -> ()
    %9 = vector.shape_cast %8 : vector<2x1x3xf32> to vector<2x3xf32>
    %10 = vector.extract_strided_slice %9 {offsets = [0, 0], sizes = [2, 2], strides = [1, 1]} : vector<2x3xf32> to vector<2x2xf32>
    %11 = vector.extract_strided_slice %9 {offsets = [0, 2], sizes = [2, 1], strides = [1, 1]} : vector<2x3xf32> to vector<2x1xf32>
    %12 = arith.truncf %10 : vector<2x2xf32> to vector<2x2xbf16>
    %c0_8 = arith.constant 0 : index
    %c0_9 = arith.constant 0 : index
    %13 = vector.load %arg4[%c0_8, %c0_9] : memref<2x32xbf16, #tpu.memory_space<vmem>>, vector<2x32xbf16>
    %cst_10 = arith.constant dense<0.000000e+00> : vector<2x32xf32>
    %14 = tpu.matmul %12, %13, %cst_10 {dimension_numbers = #tpu.dot_dimension_numbers<[1], [0], [0], [1], [0, 0, 1, 1], [], []>} : vector<2x2xbf16>, vector<2x32xbf16>, vector<2x32xf32> -> vector<2x32xf32>
    %15 = arith.addf %7, %14 : vector<2x32xf32>
    %cst_11 = arith.constant 9.99999971E-10 : f32
    %16 = vector.broadcast %cst_11 : f32 to vector<2x1xf32>
    %17 = arith.maximumf %11, %16 : vector<2x1xf32>
    %18 = tpu.reciprocal %17 {approx = true} : vector<2x1xf32> -> vector<2x1xf32>
    %19 = vector.broadcast %18 : vector<2x1xf32> to vector<2x32xf32>
    %20 = arith.mulf %15, %19 : vector<2x32xf32>
    %21 = arith.mulf %20, %20 : vector<2x32xf32>
    %cst_12 = arith.constant dense<0.000000e+00> : vector<2xf32>
    %22 = vector.multi_reduction <add>, %21, %cst_12 [1] : vector<2x32xf32> to vector<2xf32>
    %23 = vector.shape_cast %22 : vector<2xf32> to vector<2x1xf32>
    %cst_13 = arith.constant 1.000000e-24 : f32
    %24 = vector.broadcast %cst_13 : f32 to vector<2x1xf32>
    %25 = arith.maximumf %23, %24 : vector<2x1xf32>
    %26 = math.rsqrt %25 : vector<2x1xf32>
    %27 = vector.broadcast %26 : vector<2x1xf32> to vector<2x32xf32>
    %28 = arith.mulf %20, %27 : vector<2x32xf32>
    %29 = arith.truncf %28 : vector<2x32xf32> to vector<2x32xbf16>
    %c0_14 = arith.constant 0 : index
    %c0_15 = arith.constant 0 : index
    %30 = vector.load %arg5[%c0_14, %c0_15] : memref<32x48xbf16, #tpu.memory_space<vmem>>, vector<32x48xbf16>
    %cst_16 = arith.constant dense<0.000000e+00> : vector<2x48xf32>
    %31 = tpu.matmul %29, %30, %cst_16 {dimension_numbers = #tpu.dot_dimension_numbers<[1], [0], [0], [1], [0, 0, 1, 1], [], []>} : vector<2x32xbf16>, vector<32x48xbf16>, vector<2x48xf32> -> vector<2x48xf32>
    %c0_17 = arith.constant 0 : index
    %c0_18 = arith.constant 0 : index
    %32 = vector.load %arg6[%c0_17, %c0_18] : memref<1x48xf32, #tpu.memory_space<vmem>>, vector<1x48xf32>
    %33 = vector.broadcast %32 : vector<1x48xf32> to vector<2x48xf32>
    %34 = arith.addf %31, %33 : vector<2x48xf32>
    %35 = math.tanh %34 : vector<2x48xf32>
    %c0_19 = arith.constant 0 : index
    %c0_20 = arith.constant 0 : index
    %36 = vector.load %arg7[%c0_19, %c0_20] : memref<2x48xf32, #tpu.memory_space<vmem>>, vector<2x48xf32>
    tpu.vector_store %arg7[%c0_19, %c0_20], %35 {strides = array<i32>} : memref<2x48xf32, #tpu.memory_space<vmem>>, vector<2x48xf32>,
    return
  }
  func.func @transform_0(%arg0: i32) -> (i32, i32, i32) {
    %c0_i32 = arith.constant 0 : i32
    %c0_i32_0 = arith.constant 0 : i32
    %c0_i32_1 = arith.constant 0 : i32
    %c0_i32_2 = arith.constant 0 : i32
    return %c0_i32, %c0_i32_0, %c0_i32_1 : i32, i32, i32
  }
  func.func @transform_1(%arg0: i32) -> (i32, i32) {
    %c0_i32 = arith.constant 0 : i32
    %c0_i32_0 = arith.constant 0 : i32
    %c0_i32_1 = arith.constant 0 : i32
    return %c0_i32, %c0_i32_0 : i32, i32
  }
  func.func @transform_2(%arg0: i32) -> (i32, i32, i32) {
    %c0_i32 = arith.constant 0 : i32
    %c0_i32_0 = arith.constant 0 : i32
    %c0_i32_1 = arith.constant 0 : i32
    %c0_i32_2 = arith.constant 0 : i32
    return %c0_i32, %c0_i32_0, %c0_i32_1 : i32, i32, i32
  }
  func.func @transform_3(%arg0: i32) -> (i32, i32) {
    %c0_i32 = arith.constant 0 : i32
    %c0_i32_0 = arith.constant 0 : i32
    %c0_i32_1 = arith.constant 0 : i32
    return %c0_i32, %c0_i32_0 : i32, i32
  }
  func.func @transform_4(%arg0: i32) -> (i32, i32) {
    %c0_i32 = arith.constant 0 : i32
    %c0_i32_0 = arith.constant 0 : i32
    %c0_i32_1 = arith.constant 0 : i32
    return %c0_i32, %c0_i32_0 : i32, i32
  }
  func.func @transform_5(%arg0: i32) -> (i32, i32) {
    %c0_i32 = arith.constant 0 : i32
    %c0_i32_0 = arith.constant 0 : i32
    %c0_i32_1 = arith.constant 0 : i32
    return %c0_i32, %c0_i32_0 : i32, i32
  }
  func.func @transform_6(%arg0: i32) -> (i32, i32) {
    %c0_i32 = arith.constant 0 : i32
    %c0_i32_0 = arith.constant 0 : i32
    %c0_i32_1 = arith.constant 0 : i32
    return %c0_i32, %c0_i32_0 : i32, i32
  }
}

</mosaic_0001>

<llo_original>
// kernel: tpu_custom_call.1
$region0: #{tpu_custom_call.1}
  #allocation0 [shape = 'u32[]', space=smem, size = 0x4, offset = 0x4, fixed_abs, tag = 'smem constant byte address 0x4 - core index']
  #allocation1 [shape = 'u32[144,128]{1,0:T(1,128)}', space=vmem, size = 0x12000, scoped, tag = 'internal scratch']
  %s0 = inlined_call_operand.hbm [shape: bf16[2,8,32], index: 0, kind: input, shape index: {}]
  %s1 = inlined_call_operand.vmem [shape: s32[2,8], index: 1, kind: input, shape index: {}]
  %s2 = inlined_call_operand.vmem [shape: bf16[2,8,3], index: 2, kind: input, shape index: {}]
  %s3 = inlined_call_operand.hbm [shape: bf16[2,32], index: 3, kind: input, shape index: {}]
  %s4 = inlined_call_operand.vmem [shape: bf16[32,48], index: 4, kind: input, shape index: {}]
  %s5 = inlined_call_operand.vmem [shape: f32[1,48], index: 5, kind: input, shape index: {}]
  %s6 = inlined_call_operand.hbm [shape: f32[2,48], index: 6, kind: output, shape index: {}]
  %s7 = sld [smem:[#allocation0]]
  $region42: #{tpu_custom_call.1} parent=0
    _
  %s9 = ssub.s32 1, %s7
  %s10 = scalar_select 0, %s9, %s7
  $region1: #{tpu_custom_call.1} parent=0
    #allocation2 [shape = 'u8[4096]{0}', space=vmem, size = 0x1000, scoped, tag = 'input window, operand 0, single buffered']
    #allocation3 [shape = 's32[1]{0}', space=sflag, size = 0x4, scoped, tag = 'scoped memory for tpu_custom_call.1']
    #allocation4 [shape = 's32[1]{0}', space=sflag, size = 0x4, scoped, tag = 'scoped memory for tpu_custom_call.1']
    #allocation5 [shape = 'u8[512]{0}', space=vmem, size = 0x400, scoped, tag = 'input window, operand 3, single buffered']
    #allocation6 [shape = 's32[1]{0}', space=sflag, size = 0x4, scoped, tag = 'scoped memory for tpu_custom_call.1']
    #allocation7 [shape = 'u8[1024]{0}', space=vmem, size = 0x400, scoped, tag = 'output window, operand 0, single buffered']
    %11 = vsyncpa [#allocation3], 0
    %12 = vsyncpa [#allocation6], 0
    %13 = vsyncpa [#allocation4], 0
    // Predicated region
    $region2: #{tpu_custom_call.1} parent=1 // pred_check
      _
    $region3: #{tpu_custom_call.1} parent=1 // pred_check_branch
      %15 = sbr.rel (0) target = $region5
    $region4: #{tpu_custom_call.1} parent=1 // pred_region
      %s17 = ssub.s32 128, 128
      %18 = vsyncadd [#allocation3], %s17
      %s19 = sshll.u32 [#allocation2], 4
      %s20 = int_to_ptr.vmem [resolvable:$true] %s19
      %25 = dma.hbm_to_vmem [thread:$0]  %s0, 128, %s20, [#allocation3], 64, 64, 4
    $region5: #{tpu_custom_call.1} parent=1 // pred_fallthru
      _
    // Predicated region
    $region6: #{tpu_custom_call.1} parent=1 // pred_check
      _
    $region7: #{tpu_custom_call.1} parent=1 // pred_check_branch
      %27 = sbr.rel (0) target = $region9
    $region8: #{tpu_custom_call.1} parent=1 // pred_region
      _
    $region9: #{tpu_custom_call.1} parent=1 // pred_fallthru
      _
    // Predicated region
    $region10: #{tpu_custom_call.1} parent=1 // pred_check
      _
    $region11: #{tpu_custom_call.1} parent=1 // pred_check_branch
      %29 = sbr.rel (0) target = $region13
    $region12: #{tpu_custom_call.1} parent=1 // pred_region
      _
    $region13: #{tpu_custom_call.1} parent=1 // pred_fallthru
      _
    // Predicated region
    $region14: #{tpu_custom_call.1} parent=1 // pred_check
      _
    $region15: #{tpu_custom_call.1} parent=1 // pred_check_branch
      %31 = sbr.rel (0) target = $region17
    $region16: #{tpu_custom_call.1} parent=1 // pred_region
      %s33 = ssub.s32 16, 16
      %34 = vsyncadd [#allocation6], %s33
      %s36 = sshll.u32 [#allocation5], 4
      %s37 = int_to_ptr.vmem [resolvable:$true] %s36
      %39 = dma.hbm_to_vmem [thread:$0]  %s3, 16, %s37, [#allocation6]
    $region17: #{tpu_custom_call.1} parent=1 // pred_fallthru
      _
    // Predicated region
    $region18: #{tpu_custom_call.1} parent=1 // pred_check
      _
    $region19: #{tpu_custom_call.1} parent=1 // pred_check_branch
      %41 = sbr.rel (0) target = $region21
    $region20: #{tpu_custom_call.1} parent=1 // pred_region
      _
    $region21: #{tpu_custom_call.1} parent=1 // pred_fallthru
      _
    // Predicated region
    $region22: #{tpu_custom_call.1} parent=1 // pred_check
      _
    $region23: #{tpu_custom_call.1} parent=1 // pred_check_branch
      %43 = sbr.rel (0) target = $region25
    $region24: #{tpu_custom_call.1} parent=1 // pred_region
      _
    $region25: #{tpu_custom_call.1} parent=1 // pred_fallthru
      _
    // Predicated region
    $region26: #{tpu_custom_call.1} parent=1 // pred_check
      _
    $region27: #{tpu_custom_call.1} parent=1 // pred_check_branch
      %45 = sbr.rel (0) target = $region29
    $region28: #{tpu_custom_call.1} parent=1 // pred_region
      %46 = dma.done [#allocation3], 128
    $region29: #{tpu_custom_call.1} parent=1 // pred_fallthru
      _
    // Predicated region
    $region30: #{tpu_custom_call.1} parent=1 // pred_check
      _
    $region31: #{tpu_custom_call.1} parent=1 // pred_check_branch
      %48 = sbr.rel (0) target = $region33
    $region32: #{tpu_custom_call.1} parent=1 // pred_region
      %49 = dma.done [#allocation6], 16
    $region33: #{tpu_custom_call.1} parent=1 // pred_fallthru
      _
    %v51 = vld [vmem:[#allocation2] sm:$0xf]
    %v52 = vld [vmem:[#allocation2 + $0x4] sm:$0xf]
    %v53 = vld [vmem:[%s1] sm:$0x3]
    %v54 = vcvt.s32.f32 %v53
    %v55 = vpack.c.bf16 %v54, %v54
    %v56 = vld [vmem:[%s2] sm:$0xf]
    %v57 = vld [vmem:[%s2 + $0x4] sm:$0xf]
    %v60 = vunpack.c.l.s4 1966171168
    %v61 = vunpack.c.0.s8 %v60
    %v62 = vlaneseq
    %v63 = vshrl.u32 %v62, 7
    %v64 = vsub.s32 %v61, %v63
    %v65 = vrot.slane %v55, %v64
    %v67 = vunpack.c.l.s4 1966171168
    %v68 = vunpack.c.0.s8 %v67
    %v69 = vlaneseq
    %v70 = vshrl.u32 %v69, 7
    %v71 = vsub.s32 %v68, %v70
    %v72 = vrot.slane %v65, %v71
    %v73 = vunpack.i.l.s16 %v72
    %v74 = vunpack.i.h.s16 %v72
    %v75 = vpack.i.b16 %v73, %v73
    %v76 = vlaneseq
    %v77 = vshrl.u32 %v76, 7
    %v78 = vsub.s32 0, %v77
    %v79 = vrot.slane %v75, %v78
    %vm80 = vcmask 64512
    %v82 = vsel %vm80, %v79, 0
    %vm84 = vcmask 1043456
    %v86 = vsel %vm84, %v51, 0
    %88 = vmatprep.subr.bf16.mxu0 0
    %89 = vmatpush1.bf16.msra.mxu0 0
    %90 = vmatprep.subr.bf16.mxu0 0
    %91 = vmatpush1.bf16.msra.mxu0 0
    %92 = vmatprep.subr.bf16.mxu0 0
    %93 = vmatpush1.bf16.msra.mxu0 0
    %94 = vmatprep.subr.bf16.mxu0 0
    %95 = vmatpush1.bf16.msra.mxu0 0
    %96 = vmatprep.subr.bf16.mxu0 0
    %97 = vmatpush1.bf16.msra.mxu0 0
    %98 = vmatprep.subr.bf16.mxu0 0
    %99 = vmatpush1.bf16.msra.mxu0 0
    %100 = vmatprep.subr.bf16.mxu0 0
    %101 = vmatpush1.bf16.msra.mxu0 0
    %102 = vmatprep.subr.bf16.mxu0 0
    %103 = vmatpush1.bf16.msra.mxu0 %v86
    %104 = vmatprep.subr.bf16.mxu0 0
    %105 = vmatpush2.bf16.msra.mxu0 0
    %106 = vmatprep.subr.bf16.mxu0 0
    %107 = vmatpush2.bf16.msra.mxu0 0
    %108 = vmatprep.subr.bf16.mxu0 0
    %109 = vmatpush2.bf16.msra.mxu0 0
    %110 = vmatprep.subr.bf16.mxu0 0
    %111 = vmatpush2.bf16.msra.mxu0 0
    %112 = vmatprep.subr.bf16.mxu0 0
    %113 = vmatpush2.bf16.msra.mxu0 0
    %114 = vmatprep.subr.bf16.mxu0 0
    %115 = vmatpush2.bf16.msra.mxu0 0
    %116 = vmatprep.subr.bf16.mxu0 0
    %117 = vmatpush2.bf16.msra.mxu0 0
    %118 = vmatprep.subr.bf16.mxu0 0
    %119 = vmatpush2.bf16.msra.mxu0 0
    %120 = vmatprep.mubr.bf16.mxu0 0
    %121 = vmatmul.mubr.bf16.gmra.mxu0 %v82
    %v122 = vpop.f32.mrf.mxu0
    %v123 = vadd.f32 0.0, %v122
    %v124 = vpop.f32.mrf.mxu0
    %v125 = vpop.f32.mrf.mxu0
    %v126 = vpop.f32.mrf.mxu0
    %127 = vdwg.mxu0
    %v128 = vpack.i.b16 %v74, %v74
    %v129 = vlaneseq
    %v130 = vshrl.u32 %v129, 7
    %v131 = vsub.s32 0, %v130
    %v132 = vrot.slane %v128, %v131
    %v134 = vsel %vm80, %v132, 0
    %v137 = vsel %vm84, %v52, 0
    %139 = vmatprep.subr.bf16.mxu0 0
    %140 = vmatpush1.bf16.msra.mxu0 0
    %141 = vmatprep.subr.bf16.mxu0 0
    %142 = vmatpush1.bf16.msra.mxu0 0
    %143 = vmatprep.subr.bf16.mxu0 0
    %144 = vmatpush1.bf16.msra.mxu0 0
    %145 = vmatprep.subr.bf16.mxu0 0
    %146 = vmatpush1.bf16.msra.mxu0 0
    %147 = vmatprep.subr.bf16.mxu0 0
    %148 = vmatpush1.bf16.msra.mxu0 0
    %149 = vmatprep.subr.bf16.mxu0 0
    %150 = vmatpush1.bf16.msra.mxu0 0
    %151 = vmatprep.subr.bf16.mxu0 0
    %152 = vmatpush1.bf16.msra.mxu0 0
    %153 = vmatprep.subr.bf16.mxu0 0
    %154 = vmatpush1.bf16.msra.mxu0 %v137
    %155 = vmatprep.subr.bf16.mxu0 0
    %156 = vmatpush2.bf16.msra.mxu0 0
    %157 = vmatprep.subr.bf16.mxu0 0
    %158 = vmatpush2.bf16.msra.mxu0 0
    %159 = vmatprep.subr.bf16.mxu0 0
    %160 = vmatpush2.bf16.msra.mxu0 0
    %161 = vmatprep.subr.bf16.mxu0 0
    %162 = vmatpush2.bf16.msra.mxu0 0
    %163 = vmatprep.subr.bf16.mxu0 0
    %164 = vmatpush2.bf16.msra.mxu0 0
    %165 = vmatprep.subr.bf16.mxu0 0
    %166 = vmatpush2.bf16.msra.mxu0 0
    %167 = vmatprep.subr.bf16.mxu0 0
    %168 = vmatpush2.bf16.msra.mxu0 0
    %169 = vmatprep.subr.bf16.mxu0 0
    %170 = vmatpush2.bf16.msra.mxu0 0
    %171 = vmatprep.mubr.bf16.mxu0 0
    %172 = vmatmul.mubr.bf16.gmra.mxu0 %v134
    %v173 = vpop.f32.mrf.mxu0
    %v174 = vadd.f32 0.0, %v173
    %v175 = vpop.f32.mrf.mxu0
    %v176 = vpop.f32.mrf.mxu0
    %v177 = vpop.f32.mrf.mxu0
    %178 = vdwg.mxu0
    %v180 = vsel %vm84, %v56, 0
    %182 = vmatprep.subr.bf16.mxu0 0
    %183 = vmatpush1.bf16.msra.mxu0 0
    %184 = vmatprep.subr.bf16.mxu0 0
    %185 = vmatpush1.bf16.msra.mxu0 0
    %186 = vmatprep.subr.bf16.mxu0 0
    %187 = vmatpush1.bf16.msra.mxu0 0
    %188 = vmatprep.subr.bf16.mxu0 0
    %189 = vmatpush1.bf16.msra.mxu0 0
    %190 = vmatprep.subr.bf16.mxu0 0
    %191 = vmatpush1.bf16.msra.mxu0 0
    %192 = vmatprep.subr.bf16.mxu0 0
    %193 = vmatpush1.bf16.msra.mxu0 0
    %194 = vmatprep.subr.bf16.mxu0 0
    %195 = vmatpush1.bf16.msra.mxu0 0
    %196 = vmatprep.subr.bf16.mxu0 0
    %197 = vmatpush1.bf16.msra.mxu0 %v180
    %198 = vmatprep.subr.bf16.mxu0 0
    %199 = vmatpush2.bf16.msra.mxu0 0
    %200 = vmatprep.subr.bf16.mxu0 0
    %201 = vmatpush2.bf16.msra.mxu0 0
    %202 = vmatprep.subr.bf16.mxu0 0
    %203 = vmatpush2.bf16.msra.mxu0 0
    %204 = vmatprep.subr.bf16.mxu0 0
    %205 = vmatpush2.bf16.msra.mxu0 0
    %206 = vmatprep.subr.bf16.mxu0 0
    %207 = vmatpush2.bf16.msra.mxu0 0
    %208 = vmatprep.subr.bf16.mxu0 0
    %209 = vmatpush2.bf16.msra.mxu0 0
    %210 = vmatprep.subr.bf16.mxu0 0
    %211 = vmatpush2.bf16.msra.mxu0 0
    %212 = vmatprep.subr.bf16.mxu0 0
    %213 = vmatpush2.bf16.msra.mxu0 0
    %214 = vmatprep.mubr.bf16.mxu0 0
    %215 = vmatmul.mubr.bf16.gmra.mxu0 %v82
    %v216 = vpop.f32.mrf.mxu0
    %v217 = vadd.f32 0.0, %v216
    %v218 = vpop.f32.mrf.mxu0
    %v219 = vpop.f32.mrf.mxu0
    %v220 = vpop.f32.mrf.mxu0
    %221 = vdwg.mxu0
    %v223 = vsel %vm84, %v57, 0
    %225 = vmatprep.subr.bf16.mxu0 0
    %226 = vmatpush1.bf16.msra.mxu0 0
    %227 = vmatprep.subr.bf16.mxu0 0
    %228 = vmatpush1.bf16.msra.mxu0 0
    %229 = vmatprep.subr.bf16.mxu0 0
    %230 = vmatpush1.bf16.msra.mxu0 0
    %231 = vmatprep.subr.bf16.mxu0 0
    %232 = vmatpush1.bf16.msra.mxu0 0
    %233 = vmatprep.subr.bf16.mxu0 0
    %234 = vmatpush1.bf16.msra.mxu0 0
    %235 = vmatprep.subr.bf16.mxu0 0
    %236 = vmatpush1.bf16.msra.mxu0 0
    %237 = vmatprep.subr.bf16.mxu0 0
    %238 = vmatpush1.bf16.msra.mxu0 0
    %239 = vmatprep.subr.bf16.mxu0 0
    %240 = vmatpush1.bf16.msra.mxu0 %v223
    %241 = vmatprep.subr.bf16.mxu0 0
    %242 = vmatpush2.bf16.msra.mxu0 0
    %243 = vmatprep.subr.bf16.mxu0 0
    %244 = vmatpush2.bf16.msra.mxu0 0
    %245 = vmatprep.subr.bf16.mxu0 0
    %246 = vmatpush2.bf16.msra.mxu0 0
    %247 = vmatprep.subr.bf16.mxu0 0
    %248 = vmatpush2.bf16.msra.mxu0 0
    %249 = vmatprep.subr.bf16.mxu0 0
    %250 = vmatpush2.bf16.msra.mxu0 0
    %251 = vmatprep.subr.bf16.mxu0 0
    %252 = vmatpush2.bf16.msra.mxu0 0
    %253 = vmatprep.subr.bf16.mxu0 0
    %254 = vmatpush2.bf16.msra.mxu0 0
    %255 = vmatprep.subr.bf16.mxu0 0
    %256 = vmatpush2.bf16.msra.mxu0 0
    %257 = vmatprep.mubr.bf16.mxu0 0
    %258 = vmatmul.mubr.bf16.gmra.mxu0 %v134
    %v259 = vpop.f32.mrf.mxu0
    %v260 = vadd.f32 0.0, %v259
    %v261 = vpop.f32.mrf.mxu0
    %v262 = vpop.f32.mrf.mxu0
    %v263 = vpop.f32.mrf.mxu0
    %264 = vdwg.mxu0
    %v265 = vpack.c.bf16 %v217, %v217
    %v266 = vpack.c.bf16 %v260, %v260
    %v267 = vld [vmem:[#allocation5] sm:$0x1]
    %v270 = vunpack.c.l.b16 %v265
    %v271 = vunpack.c.l.b16 %v266
    %v272 = vrot.slane %v271, 7
    %vm273 = vcmask 1041409
    %v274 = vsel %vm273, %v272, %v270
    %v275 = vpack.c.b16 %v274, %v274
    %vm276 = vcmask 15360
    %v278 = vsel %vm276, %v275, 0
    %vm280 = vcmask 1040384
    %v282 = vsel %vm280, %v267, 0
    %284 = vmatprep.subr.bf16.mxu0 0
    %285 = vmatpush1.bf16.msra.mxu0 0
    %286 = vmatprep.subr.bf16.mxu0 0
    %287 = vmatpush1.bf16.msra.mxu0 0
    %288 = vmatprep.subr.bf16.mxu0 0
    %289 = vmatpush1.bf16.msra.mxu0 0
    %290 = vmatprep.subr.bf16.mxu0 0
    %291 = vmatpush1.bf16.msra.mxu0 0
    %292 = vmatprep.subr.bf16.mxu0 0
    %293 = vmatpush1.bf16.msra.mxu0 0
    %294 = vmatprep.subr.bf16.mxu0 0
    %295 = vmatpush1.bf16.msra.mxu0 0
    %296 = vmatprep.subr.bf16.mxu0 0
    %297 = vmatpush1.bf16.msra.mxu0 0
    %298 = vmatprep.subr.bf16.mxu0 0
    %299 = vmatpush1.bf16.msra.mxu0 %v282
    %300 = vmatprep.subr.bf16.mxu0 0
    %301 = vmatpush2.bf16.msra.mxu0 0
    %302 = vmatprep.subr.bf16.mxu0 0
    %303 = vmatpush2.bf16.msra.mxu0 0
    %304 = vmatprep.subr.bf16.mxu0 0
    %305 = vmatpush2.bf16.msra.mxu0 0
    %306 = vmatprep.subr.bf16.mxu0 0
    %307 = vmatpush2.bf16.msra.mxu0 0
    %308 = vmatprep.subr.bf16.mxu0 0
    %309 = vmatpush2.bf16.msra.mxu0 0
    %310 = vmatprep.subr.bf16.mxu0 0
    %311 = vmatpush2.bf16.msra.mxu0 0
    %312 = vmatprep.subr.bf16.mxu0 0
    %313 = vmatpush2.bf16.msra.mxu0 0
    %314 = vmatprep.subr.bf16.mxu0 0
    %315 = vmatpush2.bf16.msra.mxu0 0
    %316 = vmatprep.mubr.bf16.mxu0 0
    %317 = vmatmul.mubr.bf16.gmra.mxu0 %v278
    %v318 = vpop.f32.mrf.mxu0
    %v319 = vadd.f32 0.0, %v318
    %v320 = vpop.f32.mrf.mxu0
    %v321 = vpop.f32.mrf.mxu0
    %v322 = vpop.f32.mrf.mxu0
    %323 = vdwg.mxu0
    %v325 = vrot.slane %v319, 1
    %v328 = vadd.f32 %v123, %v319
    %v329 = vadd.f32 %v174, %v325
    %v330 = vmax.f32 %v217, 1e-09
    %v331 = vmax.f32 %v260, 1e-09
    %v332 = vrcp.pop %v330
    %v333 = vrcp.pop %v331
    %335 = vset.pattern.permute.xlu0 2
    %336 = vperm.xlu0 %335, %v332
    %v337 = vpop.permute.xlu0 %336
    %340 = vset.pattern.permute.xlu0 2
    %341 = vperm.xlu0 %340, %v333
    %v342 = vpop.permute.xlu0 %341
    %v344 = vmul.f32 %v328, %v337
    %v345 = vmul.f32 %v329, %v342
    %v346 = vmul.f32 %v344, %v344
    %v347 = vmul.f32 %v345, %v345
    %v350 = vrot.slane %v347, 7
    %v351 = vsel %vm273, %v350, %v346
    %vm353 = vcmask 254976
    %v354 = vsel %vm353, %v351, 0.0
    %355 = vadd.xlane.f32.xlu0 %v354
    %v356 = vpop.xlane.xlu0 %355
    %v357 = vmax.f32 %v356, 1e-24
    %v358 = vrsqrt.pop %v357
    %v360 = vrot.slane %v358, 1
    %v363 = vmul.f32 %v344, %v358
    %v364 = vmul.f32 %v345, %v360
    %v365 = vpack.c.bf16 %v363, %v363
    %v366 = vpack.c.bf16 %v364, %v364
    %v367 = vld [vmem:[%s4] sm:$0xf]
    %v368 = vld [vmem:[%s4 + $0x4] sm:$0xf]
    %v369 = vld [vmem:[%s4 + $0x8] sm:$0xf]
    %v370 = vld [vmem:[%s4 + $0xc] sm:$0xf]
    %v371 = vld [vmem:[%s5] sm:$0x1]
    %v373 = vlaneseq
    %v374 = vshrl.u32 %v373, 7
    %v375 = vsub.s32 0, %v374
    %v376 = vrot.slane %v371, %v375
    %v380 = vunpack.c.l.b16 %v365
    %v381 = vunpack.c.l.b16 %v366
    %v382 = vrot.slane %v381, 7
    %v383 = vsel %vm273, %v382, %v380
    %v384 = vpack.c.b16 %v383, %v383
    %v389 = vunpack.c.l.b16 %v367
    %v390 = vunpack.c.l.b16 %v368
    %v391 = vunpack.c.l.b16 %v369
    %v392 = vunpack.c.l.b16 %v370
    %v393 = vpack.c.b16 %v390, %v389
    %v394 = vpack.c.b16 %v392, %v391
    %vm397 = vcmask 261120
    %v399 = vsel %vm397, %v384, 0
    %401 = vmatprep.subr.bf16.mxu0 0
    %402 = vmatpush1.bf16.msra.mxu0 0
    %403 = vmatprep.subr.bf16.mxu0 0
    %404 = vmatpush1.bf16.msra.mxu0 0
    %405 = vmatprep.subr.bf16.mxu0 0
    %406 = vmatpush1.bf16.msra.mxu0 0
    %407 = vmatprep.subr.bf16.mxu0 0
    %408 = vmatpush1.bf16.msra.mxu0 0
    %409 = vmatprep.subr.bf16.mxu0 0
    %410 = vmatpush1.bf16.msra.mxu0 0
    %411 = vmatprep.subr.bf16.mxu0 0
    %412 = vmatpush1.bf16.msra.mxu0 0
    %413 = vmatprep.subr.bf16.mxu0 0
    %414 = vmatpush1.bf16.msra.mxu0 %v394
    %415 = vmatprep.subr.bf16.mxu0 0
    %416 = vmatpush1.bf16.msra.mxu0 %v393
    %417 = vmatprep.subr.bf16.mxu0 0
    %418 = vmatpush2.bf16.msra.mxu0 0
    %419 = vmatprep.subr.bf16.mxu0 0
    %420 = vmatpush2.bf16.msra.mxu0 0
    %421 = vmatprep.subr.bf16.mxu0 0
    %422 = vmatpush2.bf16.msra.mxu0 0
    %423 = vmatprep.subr.bf16.mxu0 0
    %424 = vmatpush2.bf16.msra.mxu0 0
    %425 = vmatprep.subr.bf16.mxu0 0
    %426 = vmatpush2.bf16.msra.mxu0 0
    %427 = vmatprep.subr.bf16.mxu0 0
    %428 = vmatpush2.bf16.msra.mxu0 0
    %429 = vmatprep.subr.bf16.mxu0 0
    %430 = vmatpush2.bf16.msra.mxu0 0
    %431 = vmatprep.subr.bf16.mxu0 0
    %432 = vmatpush2.bf16.msra.mxu0 0
    %433 = vmatprep.mubr.bf16.mxu0 0
    %434 = vmatmul.mubr.bf16.gmra.mxu0 %v399
    %v435 = vpop.f32.mrf.mxu0
    %v436 = vadd.f32 %v376, %v435
    %v437 = vpop.f32.mrf.mxu0
    %v438 = vpop.f32.mrf.mxu0
    %v439 = vpop.f32.mrf.mxu0
    %440 = vdwg.mxu0
    %v441 = vtanh.pop %v436
    %vm442 = vcmask 386048
    %443 = vst.msk [vmem:[#allocation7] sm:$0x3] %vm442, %v441
    // Predicated region
    $region34: #{tpu_custom_call.1} parent=1 // pred_check
      _
    $region35: #{tpu_custom_call.1} parent=1 // pred_check_branch
      %445 = sbr.rel (0) target = $region37
    $region36: #{tpu_custom_call.1} parent=1 // pred_region
      %s447 = ssub.s32 32, 32
      %448 = vsyncadd [#allocation4], %s447
      %s450 = sshll.u32 [#allocation7], 4
      %s451 = int_to_ptr.vmem [resolvable:$true] %s450
      %453 = dma.vmem_to_hbm [thread:$0]  %s451, 32, %s6, [#allocation4]
    $region37: #{tpu_custom_call.1} parent=1 // pred_fallthru
      _
    // Predicated region
    $region38: #{tpu_custom_call.1} parent=1 // pred_check
      _
    $region39: #{tpu_custom_call.1} parent=1 // pred_check_branch
      %455 = sbr.rel (0) target = $region41
    $region40: #{tpu_custom_call.1} parent=1 // pred_region
      %456 = dma.done [#allocation4], 32
    $region41: #{tpu_custom_call.1} parent=1 // pred_fallthru
      _
    %457 = vsyncpa [#allocation3], 1
    %458 = vsyncpa [#allocation6], 1
    %459 = vsyncpa [#allocation4], 1

</llo_original>
